<compile_context>
chip_gen: v5e
topology: v5e:2x2
jax: 0.10.0
libtpu: 0.0.40
codegen_flags: <defaults>
</compile_context>

<pallas_src>
import math

import jax
import jax.numpy as jnp
from jax import lax
from jax.experimental import pallas as pl
from jax.experimental.pallas import tpu as pltpu


def group_encoder_kernel(rT_ref, xF_ref, w1_ref, w2_ref, o_ref):
    # rT_ref: (Bn, R, IJ)    r per sample, transposed so K = I*J sits on lanes
    # xF_ref: (Bn, IJ, X)    x per sample, flattened to (K, N) form
    # w1_ref: (R*X, V*H)     w1 pre-permuted, lane-dense (V*H columns)
    # w2_ref: (R*V*H, U*V)   w2 pre-expanded block-diagonally over v, lane-dense
    # o_ref : (Bn, R, U*V)   lane-dense output block
    bn, r_dim, ij = rT_ref.shape
    x_dim = xF_ref.shape[2]
    vh = w1_ref.shape[1]
    inv_norm = 1.0 / float(ij)

    w1 = w1_ref[...]
    w2 = w2_ref[...]

    # Block-diagonal selection masks (constant; built once per grid step,
    # hoisted out of the per-sample loop).  mask1[r, r'*X + x]  = (r == r')
    #                                       mask2[r, r'*VH + m] = (r == r')
    rows1 = lax.broadcasted_iota(jnp.int32, (r_dim, r_dim * x_dim), 0)
    cols1 = lax.broadcasted_iota(jnp.int32, (r_dim, r_dim * x_dim), 1)
    mask1 = (cols1 >= rows1 * x_dim) & (cols1 < (rows1 + 1) * x_dim)

    rows2 = lax.broadcasted_iota(jnp.int32, (r_dim, r_dim * vh), 0)
    cols2 = lax.broadcasted_iota(jnp.int32, (r_dim, r_dim * vh), 1)
    mask2 = (cols2 >= rows2 * vh) & (cols2 < (rows2 + 1) * vh)

    # Bn is a small static block size -> fully unrolled loop.
    for b in range(bn):
        # ---- Step 1: u1[r, x] = (1/IJ) * sum_ij r[ij, r] * x[ij, x]
        # MXU-canonical (M,K)@(K,N): K = I*J is on the LHS lane axis.
        u1 = lax.dot_general(
            rT_ref[b], xF_ref[b], (((1,), (0,)), ((), ())),
            preferred_element_type=jnp.float32) * inv_norm            # (R, X) f32

        # ---- Step 2: u2[r, v*H+h] = relu(sum_x w1[x,r,v,h] * u1[r, x])
        # Per-r matvec expressed as one lane-dense 2D MXU matmul via a
        # block-diagonal LHS: lhs1[r, r'*X + x] = u1[r, x] if r == r' else 0.
        lhs1 = jnp.where(
            mask1, jnp.concatenate([u1] * r_dim, axis=1), 0.0)        # (R, R*X)
        u2 = lax.dot_general(
            lhs1.astype(w1.dtype), w1, (((1,), (0,)), ((), ())),
            preferred_element_type=jnp.float32)                       # (R, V*H) f32
        u2 = jnp.maximum(u2, 0.0)

        # ---- Step 3: u4[r, u*V+v] = sum_h w2[r,u,v,h] * u2[r, v*H+h]
        # Same block-diagonal-LHS trick; the v-diagonal is folded into w2_ref.
        lhs2 = jnp.where(
            mask2, jnp.concatenate([u2] * r_dim, axis=1), 0.0)        # (R, R*V*H)
        u4 = lax.dot_general(
            lhs2.astype(w2.dtype), w2, (((1,), (0,)), ((), ())),
            preferred_element_type=jnp.float32)                       # (R, U*V) f32

        # Lane-dense store: last dim is U*V (reshaped to (U, V) in the wrapper).
        o_ref[b] = u4.astype(o_ref.dtype)


def _pick_batch_block(n, max_bn=8):
    # Largest divisor of n that is <= max_bn (amortizes per-grid-step overhead).
    for bn in range(min(n, max_bn), 0, -1):
        if n % bn == 0:
            return bn
    return 1


def group_encoder_forward(x, r, w1, w2, *, batch_block=None):
    n, i_dim, j_dim, x_dim = x.shape
    r_dim = r.shape[-1]
    r_dim_w, u_dim, v_dim, h_dim = w2.shape
    assert w1.shape == (x_dim, r_dim, v_dim, h_dim)
    assert r_dim_w == r_dim

    ij = i_dim * j_dim
    vh = v_dim * h_dim
    uv = u_dim * v_dim

    bn = batch_block if batch_block is not None else _pick_batch_block(n)
    assert n % bn == 0

    # ---- Wrapper-side layout plumbing (pure data movement, done once by XLA) ----
    # Step-1 operands: LHS (R, IJ) with K = I*J on lanes, RHS (IJ, X).
    r_t = jnp.transpose(r.reshape(n, ij, r_dim), (0, 2, 1))            # (N, R, IJ)
    x_f = x.reshape(n, ij, x_dim)                                      # (N, IJ, X)

    # w1 as a dense (R*X, V*H) matrix: lane-dense last dim (V*H = 128 here).
    w1_flat = jnp.transpose(w1, (1, 0, 2, 3)).reshape(r_dim * x_dim, vh)

    # w2 expanded block-diagonally over v into (R*V*H, U*V) so step 3 is a single
    # lane-dense 2D MXU matmul that directly produces the (R, U*V) output layout.
    # TODO(synk): for large V, replace this V-fold expansion with a (R*V, H, U)
    # batched contraction or a grid axis over V to keep HBM/VMEM footprint dense
    # (matters under v7x's 64 MiB VMEM budget).
    eye_v = jnp.eye(v_dim, dtype=w2.dtype)
    w2_flat = jnp.einsum('ruvh,vw->rvhuw', w2, eye_v).reshape(r_dim * vh, uv)

    out_flat = pl.pallas_call(
        group_encoder_kernel,
        out_shape=jax.ShapeDtypeStruct((n, r_dim, uv), jnp.float32),
        grid_spec=pltpu.PrefetchScalarGridSpec(
            num_scalar_prefetch=0,
            grid=(n // bn,),
            in_specs=[
                pl.BlockSpec((bn, r_dim, ij), lambda b: (b, 0, 0)),
                pl.BlockSpec((bn, ij, x_dim), lambda b: (b, 0, 0)),
                # Weight blocks are grid-invariant (index 0 for every step).
                # TODO(synk): on v7x, single-buffer these (pl.Buffered(1)) or stage
                # them once via memory_space=pl.ANY to halve their VMEM reservation.
                pl.BlockSpec((r_dim * x_dim, vh), lambda b: (0, 0)),
                pl.BlockSpec((r_dim * vh, uv), lambda b: (0, 0)),
            ],
            out_specs=pl.BlockSpec((bn, r_dim, uv), lambda b: (b, 0, 0)),
        ),
        compiler_params=pltpu.CompilerParams(
            dimension_semantics=("parallel",),
            vmem_limit_bytes=32 * 1024 * 1024,
        ),
    )(r_t, x_f, w1_flat, w2_flat)

    # Trailing reshape back to the module's (N, R, U, V) output layout.
    return out_flat.reshape(n, r_dim, u_dim, v_dim)


def xavier_uniform(key, shape):
    # PyTorch xavier_uniform_ on a 4D tensor:
    #   receptive = prod(shape[2:]); fan_in = shape[1]*receptive; fan_out = shape[0]*receptive
    receptive = 1
    for s in shape[2:]:
        receptive *= s
    fan_in = shape[1] * receptive
    fan_out = shape[0] * receptive
    bound = math.sqrt(6.0 / (fan_in + fan_out))
    return jax.random.uniform(key, shape, jnp.float32, minval=-bound, maxval=bound)


def reference_forward(x, r, w1, w2):
    norm = x.shape[1] * x.shape[2]
    u = jnp.einsum('nijx,nijr->nxr', x, r) / norm
    u = jnp.einsum('xrvh,nxr->nrvh', w1, u)
    u = jax.nn.relu(u)
    u = jnp.einsum('ruvh,nrvh->nruv', w2, u)
    return u


if __name__ == "__main__":
    # Small, deterministic shapes consistent with the module's einsums.
    N, I, J = 2, 8, 8
    X_DIM, R_DIM, U_DIM, V_DIM, H_DIM = 8, 8, 8, 8, 16

    key = jax.random.PRNGKey(0)
    kx, kr, kw1, kw2 = jax.random.split(key, 4)

    x = jax.random.normal(kx, (N, I, J, X_DIM), jnp.float32)
    r = jax.random.normal(kr, (N, I, J, R_DIM), jnp.float32)
    w1 = xavier_uniform(kw1, (X_DIM, R_DIM, V_DIM, H_DIM))
    w2 = xavier_uniform(kw2, (R_DIM, U_DIM, V_DIM, H_DIM))

    out = group_encoder_forward(x, r, w1, w2)
    out = jax.block_until_ready(out)

    ref = reference_forward(x, r, w1, w2)
    assert out.shape == (N, R_DIM, U_DIM, V_DIM)
    assert jnp.allclose(out, ref, atol=1e-5, rtol=1e-5), "mismatch vs reference"

    print("KERNEL_OK")
</pallas_src>

<mosaic_0001>
module attributes {stable_mosaic.version = 11 : i64} {
  func.func @group_encoder_kernel(%arg0: i32, %arg1: memref<2x8x64xf32, #tpu.memory_space<vmem>>, %arg2: memref<2x64x8xf32, #tpu.memory_space<vmem>>, %arg3: memref<64x128xf32, #tpu.memory_space<vmem>>, %arg4: memref<1024x64xf32, #tpu.memory_space<vmem>>, %arg5: memref<2x8x64xf32, #tpu.memory_space<vmem>>) attributes {dimension_semantics = [#tpu.dimension_semantics<parallel>], iteration_bounds = array<i64: 1>, scalar_prefetch = 0 : i64, scratch_operands = 0 : i64, tpu.core_type = #tpu.core_type<tc>, window_params = [{transform_indices = @transform_0, window_bounds = array<i64: 2, 8, 64>}, {transform_indices = @transform_1, window_bounds = array<i64: 2, 64, 8>}, {pipeline_mode = #tpu.pipeline_mode<synchronous>, transform_indices = @transform_2, window_bounds = array<i64: 64, 128>}, {pipeline_mode = #tpu.pipeline_mode<synchronous>, transform_indices = @transform_3, window_bounds = array<i64: 1024, 64>}, {transform_indices = @transform_4, window_bounds = array<i64: 2, 8, 64>}]} {
    %c0 = arith.constant 0 : index
    %c0_0 = arith.constant 0 : index
    %0 = vector.load %arg3[%c0, %c0_0] : memref<64x128xf32, #tpu.memory_space<vmem>>, vector<64x128xf32>
    %c0_1 = arith.constant 0 : index
    %c0_2 = arith.constant 0 : index
    %1 = vector.load %arg4[%c0_1, %c0_2] : memref<1024x64xf32, #tpu.memory_space<vmem>>, vector<1024x64xf32>
    %2 = tpu.iota {dimensions = array<i32: 0>} : vector<8x64xi32>
    %3 = tpu.iota {dimensions = array<i32: 1>} : vector<8x64xi32>
    %c8_i32 = arith.constant 8 : i32
    %4 = vector.broadcast %c8_i32 : i32 to vector<8x64xi32>
    %5 = arith.muli %2, %4 : vector<8x64xi32>
    %6 = arith.cmpi sge, %3, %5 : vector<8x64xi32>
    %c1_i32 = arith.constant 1 : i32
    %7 = vector.broadcast %c1_i32 : i32 to vector<8x64xi32>
    %8 = arith.addi %2, %7 : vector<8x64xi32>
    %c8_i32_3 = arith.constant 8 : i32
    %9 = vector.broadcast %c8_i32_3 : i32 to vector<8x64xi32>
    %10 = arith.muli %8, %9 : vector<8x64xi32>
    %11 = arith.cmpi slt, %3, %10 : vector<8x64xi32>
    %12 = arith.andi %6, %11 : vector<8x64xi1>
    %13 = tpu.iota {dimensions = array<i32: 0>} : vector<8x1024xi32>
    %14 = tpu.iota {dimensions = array<i32: 1>} : vector<8x1024xi32>
    %c128_i32 = arith.constant 128 : i32
    %15 = vector.broadcast %c128_i32 : i32 to vector<8x1024xi32>
    %16 = arith.muli %13, %15 : vector<8x1024xi32>
    %17 = arith.cmpi sge, %14, %16 : vector<8x1024xi32>
    %c1_i32_4 = arith.constant 1 : i32
    %18 = vector.broadcast %c1_i32_4 : i32 to vector<8x1024xi32>
    %19 = arith.addi %13, %18 : vector<8x1024xi32>
    %c128_i32_5 = arith.constant 128 : i32
    %20 = vector.broadcast %c128_i32_5 : i32 to vector<8x1024xi32>
    %21 = arith.muli %19, %20 : vector<8x1024xi32>
    %22 = arith.cmpi slt, %14, %21 : vector<8x1024xi32>
    %23 = arith.andi %17, %22 : vector<8x1024xi1>
    %c0_6 = arith.constant 0 : index
    %c0_7 = arith.constant 0 : index
    %c0_8 = arith.constant 0 : index
    %24 = vector.load %arg1[%c0_6, %c0_7, %c0_8] : memref<2x8x64xf32, #tpu.memory_space<vmem>>, vector<1x8x64xf32>
    %25 = vector.shape_cast %24 : vector<1x8x64xf32> to vector<8x64xf32>
    %c0_9 = arith.constant 0 : index
    %c0_10 = arith.constant 0 : index
    %c0_11 = arith.constant 0 : index
    %26 = vector.load %arg2[%c0_9, %c0_10, %c0_11] : memref<2x64x8xf32, #tpu.memory_space<vmem>>, vector<1x64x8xf32>
    %27 = vector.shape_cast %26 : vector<1x64x8xf32> to vector<64x8xf32>
    %cst = arith.constant dense<0.000000e+00> : vector<8x8xf32>
    %28 = tpu.matmul %25, %27, %cst {dimension_numbers = #tpu.dot_dimension_numbers<[1], [0], [0], [1], [0, 0, 1, 1], [], []>} : vector<8x64xf32>, vector<64x8xf32>, vector<8x8xf32> -> vector<8x8xf32>
    %cst_12 = arith.constant 1.562500e-02 : f32
    %29 = vector.broadcast %cst_12 : f32 to vector<8x8xf32>
    %30 = arith.mulf %28, %29 : vector<8x8xf32>
    %31 = tpu.concatenate %30, %30, %30, %30, %30, %30, %30, %30 in 1 : vector<8x8xf32>, vector<8x8xf32>, vector<8x8xf32>, vector<8x8xf32>, vector<8x8xf32>, vector<8x8xf32>, vector<8x8xf32>, vector<8x8xf32> -> vector<8x64xf32>
    %cst_13 = arith.constant 0.000000e+00 : f32
    %32 = vector.broadcast %cst_13 : f32 to vector<8x64xf32>
    %33 = arith.select %12, %31, %32 : vector<8x64xi1>, vector<8x64xf32>
    %cst_14 = arith.constant dense<0.000000e+00> : vector<8x128xf32>
    %34 = tpu.matmul %33, %0, %cst_14 {dimension_numbers = #tpu.dot_dimension_numbers<[1], [0], [0], [1], [0, 0, 1, 1], [], []>} : vector<8x64xf32>, vector<64x128xf32>, vector<8x128xf32> -> vector<8x128xf32>
    %cst_15 = arith.constant 0.000000e+00 : f32
    %35 = vector.broadcast %cst_15 : f32 to vector<8x128xf32>
    %36 = arith.maximumf %34, %35 : vector<8x128xf32>
    %37 = tpu.concatenate %36, %36, %36, %36, %36, %36, %36, %36 in 1 : vector<8x128xf32>, vector<8x128xf32>, vector<8x128xf32>, vector<8x128xf32>, vector<8x128xf32>, vector<8x128xf32>, vector<8x128xf32>, vector<8x128xf32> -> vector<8x1024xf32>
    %cst_16 = arith.constant 0.000000e+00 : f32
    %38 = vector.broadcast %cst_16 : f32 to vector<8x1024xf32>
    %39 = arith.select %23, %37, %38 : vector<8x1024xi1>, vector<8x1024xf32>
    %cst_17 = arith.constant dense<0.000000e+00> : vector<8x64xf32>
    %40 = tpu.matmul %39, %1, %cst_17 {dimension_numbers = #tpu.dot_dimension_numbers<[1], [0], [0], [1], [0, 0, 1, 1], [], []>} : vector<8x1024xf32>, vector<1024x64xf32>, vector<8x64xf32> -> vector<8x64xf32>
    %c0_18 = arith.constant 0 : index
    %c0_19 = arith.constant 0 : index
    %c0_20 = arith.constant 0 : index
    %41 = vector.load %arg5[%c0_18, %c0_19, %c0_20] : memref<2x8x64xf32, #tpu.memory_space<vmem>>, vector<1x8x64xf32>
    %42 = vector.shape_cast %41 : vector<1x8x64xf32> to vector<8x64xf32>
    %43 = vector.shape_cast %40 : vector<8x64xf32> to vector<1x8x64xf32>
    tpu.vector_store %arg5[%c0_18, %c0_19, %c0_20], %43 {strides = array<i32>} : memref<2x8x64xf32, #tpu.memory_space<vmem>>, vector<1x8x64xf32>,
    %c1 = arith.constant 1 : index
    %c0_21 = arith.constant 0 : index
    %c0_22 = arith.constant 0 : index
    %44 = vector.load %arg1[%c1, %c0_21, %c0_22] : memref<2x8x64xf32, #tpu.memory_space<vmem>>, vector<1x8x64xf32>
    %45 = vector.shape_cast %44 : vector<1x8x64xf32> to vector<8x64xf32>
    %c1_23 = arith.constant 1 : index
    %c0_24 = arith.constant 0 : index
    %c0_25 = arith.constant 0 : index
    %46 = vector.load %arg2[%c1_23, %c0_24, %c0_25] : memref<2x64x8xf32, #tpu.memory_space<vmem>>, vector<1x64x8xf32>
    %47 = vector.shape_cast %46 : vector<1x64x8xf32> to vector<64x8xf32>
    %cst_26 = arith.constant dense<0.000000e+00> : vector<8x8xf32>
    %48 = tpu.matmul %45, %47, %cst_26 {dimension_numbers = #tpu.dot_dimension_numbers<[1], [0], [0], [1], [0, 0, 1, 1], [], []>} : vector<8x64xf32>, vector<64x8xf32>, vector<8x8xf32> -> vector<8x8xf32>
    %cst_27 = arith.constant 1.562500e-02 : f32
    %49 = vector.broadcast %cst_27 : f32 to vector<8x8xf32>
    %50 = arith.mulf %48, %49 : vector<8x8xf32>
    %51 = tpu.concatenate %50, %50, %50, %50, %50, %50, %50, %50 in 1 : vector<8x8xf32>, vector<8x8xf32>, vector<8x8xf32>, vector<8x8xf32>, vector<8x8xf32>, vector<8x8xf32>, vector<8x8xf32>, vector<8x8xf32> -> vector<8x64xf32>
    %cst_28 = arith.constant 0.000000e+00 : f32
    %52 = vector.broadcast %cst_28 : f32 to vector<8x64xf32>
    %53 = arith.select %12, %51, %52 : vector<8x64xi1>, vector<8x64xf32>
    %cst_29 = arith.constant dense<0.000000e+00> : vector<8x128xf32>
    %54 = tpu.matmul %53, %0, %cst_29 {dimension_numbers = #tpu.dot_dimension_numbers<[1], [0], [0], [1], [0, 0, 1, 1], [], []>} : vector<8x64xf32>, vector<64x128xf32>, vector<8x128xf32> -> vector<8x128xf32>
    %cst_30 = arith.constant 0.000000e+00 : f32
    %55 = vector.broadcast %cst_30 : f32 to vector<8x128xf32>
    %56 = arith.maximumf %54, %55 : vector<8x128xf32>
    %57 = tpu.concatenate %56, %56, %56, %56, %56, %56, %56, %56 in 1 : vector<8x128xf32>, vector<8x128xf32>, vector<8x128xf32>, vector<8x128xf32>, vector<8x128xf32>, vector<8x128xf32>, vector<8x128xf32>, vector<8x128xf32> -> vector<8x1024xf32>
    %cst_31 = arith.constant 0.000000e+00 : f32
    %58 = vector.broadcast %cst_31 : f32 to vector<8x1024xf32>
    %59 = arith.select %23, %57, %58 : vector<8x1024xi1>, vector<8x1024xf32>
    %cst_32 = arith.constant dense<0.000000e+00> : vector<8x64xf32>
    %60 = tpu.matmul %59, %1, %cst_32 {dimension_numbers = #tpu.dot_dimension_numbers<[1], [0], [0], [1], [0, 0, 1, 1], [], []>} : vector<8x1024xf32>, vector<1024x64xf32>, vector<8x64xf32> -> vector<8x64xf32>
    %c1_33 = arith.constant 1 : index
    %c0_34 = arith.constant 0 : index
    %c0_35 = arith.constant 0 : index
    %61 = vector.load %arg5[%c1_33, %c0_34, %c0_35] : memref<2x8x64xf32, #tpu.memory_space<vmem>>, vector<1x8x64xf32>
    %62 = vector.shape_cast %61 : vector<1x8x64xf32> to vector<8x64xf32>
    %63 = vector.shape_cast %60 : vector<8x64xf32> to vector<1x8x64xf32>
    tpu.vector_store %arg5[%c1_33, %c0_34, %c0_35], %63 {strides = array<i32>} : memref<2x8x64xf32, #tpu.memory_space<vmem>>, vector<1x8x64xf32>,
    return
  }
  func.func @transform_0(%arg0: i32) -> (i32, i32, i32) {
    %c0_i32 = arith.constant 0 : i32
    %c0_i32_0 = arith.constant 0 : i32
    %c0_i32_1 = arith.constant 0 : i32
    return %arg0, %c0_i32, %c0_i32_0 : i32, i32, i32
  }
  func.func @transform_1(%arg0: i32) -> (i32, i32, i32) {
    %c0_i32 = arith.constant 0 : i32
    %c0_i32_0 = arith.constant 0 : i32
    %c0_i32_1 = arith.constant 0 : i32
    return %arg0, %c0_i32, %c0_i32_0 : i32, i32, i32
  }
  func.func @transform_2(%arg0: i32) -> (i32, i32) {
    %c0_i32 = arith.constant 0 : i32
    %c0_i32_0 = arith.constant 0 : i32
    %c0_i32_1 = arith.constant 0 : i32
    return %c0_i32, %c0_i32_0 : i32, i32
  }
  func.func @transform_3(%arg0: i32) -> (i32, i32) {
    %c0_i32 = arith.constant 0 : i32
    %c0_i32_0 = arith.constant 0 : i32
    %c0_i32_1 = arith.constant 0 : i32
    return %c0_i32, %c0_i32_0 : i32, i32
  }
  func.func @transform_4(%arg0: i32) -> (i32, i32, i32) {
    %c0_i32 = arith.constant 0 : i32
    %c0_i32_0 = arith.constant 0 : i32
    %c0_i32_1 = arith.constant 0 : i32
    return %arg0, %c0_i32, %c0_i32_0 : i32, i32, i32
  }
}

</mosaic_0001>

<llo_original>
// kernel: tpu_custom_call.1
$region0: #{tpu_custom_call.1}
  #allocation0 [shape = 'u32[]', space=smem, size = 0x4, offset = 0x4, fixed_abs, tag = 'smem constant byte address 0x4 - core index']
  #allocation1 [shape = 'u32[72,128]{1,0:T(1,128)}', space=vmem, size = 0x9000, scoped, tag = 'internal scratch']
  %s0 = inlined_call_operand.vmem [shape: f32[2,8,64], index: 0, kind: input, shape index: {}]
  %s1 = inlined_call_operand.vmem [shape: f32[2,64,8], index: 1, kind: input, shape index: {}]
  %s2 = inlined_call_operand.vmem [shape: f32[64,128], index: 2, kind: input, shape index: {}]
  %s3 = inlined_call_operand.vmem [shape: f32[1024,64], index: 3, kind: input, shape index: {}]
  %s4 = inlined_call_operand.hbm [shape: f32[2,8,64], index: 4, kind: output, shape index: {}]
  %s5 = sld [smem:[#allocation0]]
  $region26: #{tpu_custom_call.1} parent=0
    _
  %s7 = ssub.s32 1, %s5
  %s8 = scalar_select 0, %s7, %s5
  $region1: #{tpu_custom_call.1} parent=0
    #allocation2 [shape = 'u8[8192]{0}', space=vmem, size = 0x2000, scoped, tag = 'output window, operand 0, single buffered']
    #allocation3 [shape = 's32[1]{0}', space=sflag, size = 0x4, scoped, tag = 'scoped memory for tpu_custom_call.1']
    %9 = vsyncpa [#allocation3], 0
    // Predicated region
    $region2: #{tpu_custom_call.1} parent=1 // pred_check
      _
    $region3: #{tpu_custom_call.1} parent=1 // pred_check_branch
      %11 = sbr.rel (0) target = $region5
    $region4: #{tpu_custom_call.1} parent=1 // pred_region
      _
    $region5: #{tpu_custom_call.1} parent=1 // pred_fallthru
      _
    // Predicated region
    $region6: #{tpu_custom_call.1} parent=1 // pred_check
      _
    $region7: #{tpu_custom_call.1} parent=1 // pred_check_branch
      %13 = sbr.rel (0) target = $region9
    $region8: #{tpu_custom_call.1} parent=1 // pred_region
      _
    $region9: #{tpu_custom_call.1} parent=1 // pred_fallthru
      _
    // Predicated region
    $region10: #{tpu_custom_call.1} parent=1 // pred_check
      _
    $region11: #{tpu_custom_call.1} parent=1 // pred_check_branch
      %15 = sbr.rel (0) target = $region13
    $region12: #{tpu_custom_call.1} parent=1 // pred_region
      _
    $region13: #{tpu_custom_call.1} parent=1 // pred_fallthru
      _
    // Predicated region
    $region14: #{tpu_custom_call.1} parent=1 // pred_check
      _
    $region15: #{tpu_custom_call.1} parent=1 // pred_check_branch
      %17 = sbr.rel (0) target = $region17
    $region16: #{tpu_custom_call.1} parent=1 // pred_region
      _
    $region17: #{tpu_custom_call.1} parent=1 // pred_fallthru
      _
    %v18 = vld [vmem:[%s2] sm:$0xff]
    %v19 = vld [vmem:[%s2 + $0x8] sm:$0xff]
    %v20 = vld [vmem:[%s2 + $0x10] sm:$0xff]
    %v21 = vld [vmem:[%s2 + $0x18] sm:$0xff]
    %v22 = vld [vmem:[%s2 + $0x20] sm:$0xff]
    %v23 = vld [vmem:[%s2 + $0x28] sm:$0xff]
    %v24 = vld [vmem:[%s2 + $0x30] sm:$0xff]
    %v25 = vld [vmem:[%s2 + $0x38] sm:$0xff]
    %v26 = vld [vmem:[%s3] sm:$0xff]
    %v27 = vld [vmem:[%s3 + $0x8] sm:$0xff]
    %v28 = vld [vmem:[%s3 + $0x10] sm:$0xff]
    %v29 = vld [vmem:[%s3 + $0x18] sm:$0xff]
    %v30 = vld [vmem:[%s3 + $0x20] sm:$0xff]
    %v31 = vld [vmem:[%s3 + $0x28] sm:$0xff]
    %v32 = vld [vmem:[%s3 + $0x30] sm:$0xff]
    %v33 = vld [vmem:[%s3 + $0x38] sm:$0xff]
    %v34 = vld [vmem:[%s3 + $0x40] sm:$0xff]
    %v35 = vld [vmem:[%s3 + $0x48] sm:$0xff]
    %v36 = vld [vmem:[%s3 + $0x50] sm:$0xff]
    %v37 = vld [vmem:[%s3 + $0x58] sm:$0xff]
    %v38 = vld [vmem:[%s3 + $0x60] sm:$0xff]
    %v39 = vld [vmem:[%s3 + $0x68] sm:$0xff]
    %v40 = vld [vmem:[%s3 + $0x70] sm:$0xff]
    %v41 = vld [vmem:[%s3 + $0x78] sm:$0xff]
    %v42 = vld [vmem:[%s3 + $0x80] sm:$0xff]
    %v43 = vld [vmem:[%s3 + $0x88] sm:$0xff]
    %v44 = vld [vmem:[%s3 + $0x90] sm:$0xff]
    %v45 = vld [vmem:[%s3 + $0x98] sm:$0xff]
    %v46 = vld [vmem:[%s3 + $0xa0] sm:$0xff]
    %v47 = vld [vmem:[%s3 + $0xa8] sm:$0xff]
    %v48 = vld [vmem:[%s3 + $0xb0] sm:$0xff]
    %v49 = vld [vmem:[%s3 + $0xb8] sm:$0xff]
    %v50 = vld [vmem:[%s3 + $0xc0] sm:$0xff]
    %v51 = vld [vmem:[%s3 + $0xc8] sm:$0xff]
    %v52 = vld [vmem:[%s3 + $0xd0] sm:$0xff]
    %v53 = vld [vmem:[%s3 + $0xd8] sm:$0xff]
    %v54 = vld [vmem:[%s3 + $0xe0] sm:$0xff]
    %v55 = vld [vmem:[%s3 + $0xe8] sm:$0xff]
    %v56 = vld [vmem:[%s3 + $0xf0] sm:$0xff]
    %v57 = vld [vmem:[%s3 + $0xf8] sm:$0xff]
    %v58 = vld [vmem:[%s3 + $0x100] sm:$0xff]
    %v59 = vld [vmem:[%s3 + $0x108] sm:$0xff]
    %v60 = vld [vmem:[%s3 + $0x110] sm:$0xff]
    %v61 = vld [vmem:[%s3 + $0x118] sm:$0xff]
    %v62 = vld [vmem:[%s3 + $0x120] sm:$0xff]
    %v63 = vld [vmem:[%s3 + $0x128] sm:$0xff]
    %v64 = vld [vmem:[%s3 + $0x130] sm:$0xff]
    %v65 = vld [vmem:[%s3 + $0x138] sm:$0xff]
    %v66 = vld [vmem:[%s3 + $0x140] sm:$0xff]
    %v67 = vld [vmem:[%s3 + $0x148] sm:$0xff]
    %v68 = vld [vmem:[%s3 + $0x150] sm:$0xff]
    %v69 = vld [vmem:[%s3 + $0x158] sm:$0xff]
    %v70 = vld [vmem:[%s3 + $0x160] sm:$0xff]
    %v71 = vld [vmem:[%s3 + $0x168] sm:$0xff]
    %v72 = vld [vmem:[%s3 + $0x170] sm:$0xff]
    %v73 = vld [vmem:[%s3 + $0x178] sm:$0xff]
    %v74 = vld [vmem:[%s3 + $0x180] sm:$0xff]
    %v75 = vld [vmem:[%s3 + $0x188] sm:$0xff]
    %v76 = vld [vmem:[%s3 + $0x190] sm:$0xff]
    %v77 = vld [vmem:[%s3 + $0x198] sm:$0xff]
    %v78 = vld [vmem:[%s3 + $0x1a0] sm:$0xff]
    %v79 = vld [vmem:[%s3 + $0x1a8] sm:$0xff]
    %v80 = vld [vmem:[%s3 + $0x1b0] sm:$0xff]
    %v81 = vld [vmem:[%s3 + $0x1b8] sm:$0xff]
    %v82 = vld [vmem:[%s3 + $0x1c0] sm:$0xff]
    %v83 = vld [vmem:[%s3 + $0x1c8] sm:$0xff]
    %v84 = vld [vmem:[%s3 + $0x1d0] sm:$0xff]
    %v85 = vld [vmem:[%s3 + $0x1d8] sm:$0xff]
    %v86 = vld [vmem:[%s3 + $0x1e0] sm:$0xff]
    %v87 = vld [vmem:[%s3 + $0x1e8] sm:$0xff]
    %v88 = vld [vmem:[%s3 + $0x1f0] sm:$0xff]
    %v89 = vld [vmem:[%s3 + $0x1f8] sm:$0xff]
    %v90 = vld [vmem:[%s3 + $0x200] sm:$0xff]
    %v91 = vld [vmem:[%s3 + $0x208] sm:$0xff]
    %v92 = vld [vmem:[%s3 + $0x210] sm:$0xff]
    %v93 = vld [vmem:[%s3 + $0x218] sm:$0xff]
    %v94 = vld [vmem:[%s3 + $0x220] sm:$0xff]
    %v95 = vld [vmem:[%s3 + $0x228] sm:$0xff]
    %v96 = vld [vmem:[%s3 + $0x230] sm:$0xff]
    %v97 = vld [vmem:[%s3 + $0x238] sm:$0xff]
    %v98 = vld [vmem:[%s3 + $0x240] sm:$0xff]
    %v99 = vld [vmem:[%s3 + $0x248] sm:$0xff]
    %v100 = vld [vmem:[%s3 + $0x250] sm:$0xff]
    %v101 = vld [vmem:[%s3 + $0x258] sm:$0xff]
    %v102 = vld [vmem:[%s3 + $0x260] sm:$0xff]
    %v103 = vld [vmem:[%s3 + $0x268] sm:$0xff]
    %v104 = vld [vmem:[%s3 + $0x270] sm:$0xff]
    %v105 = vld [vmem:[%s3 + $0x278] sm:$0xff]
    %v106 = vld [vmem:[%s3 + $0x280] sm:$0xff]
    %v107 = vld [vmem:[%s3 + $0x288] sm:$0xff]
    %v108 = vld [vmem:[%s3 + $0x290] sm:$0xff]
    %v109 = vld [vmem:[%s3 + $0x298] sm:$0xff]
    %v110 = vld [vmem:[%s3 + $0x2a0] sm:$0xff]
    %v111 = vld [vmem:[%s3 + $0x2a8] sm:$0xff]
    %v112 = vld [vmem:[%s3 + $0x2b0] sm:$0xff]
    %v113 = vld [vmem:[%s3 + $0x2b8] sm:$0xff]
    %v114 = vld [vmem:[%s3 + $0x2c0] sm:$0xff]
    %v115 = vld [vmem:[%s3 + $0x2c8] sm:$0xff]
    %v116 = vld [vmem:[%s3 + $0x2d0] sm:$0xff]
    %v117 = vld [vmem:[%s3 + $0x2d8] sm:$0xff]
    %v118 = vld [vmem:[%s3 + $0x2e0] sm:$0xff]
    %v119 = vld [vmem:[%s3 + $0x2e8] sm:$0xff]
    %v120 = vld [vmem:[%s3 + $0x2f0] sm:$0xff]
    %v121 = vld [vmem:[%s3 + $0x2f8] sm:$0xff]
    %v122 = vld [vmem:[%s3 + $0x300] sm:$0xff]
    %v123 = vld [vmem:[%s3 + $0x308] sm:$0xff]
    %v124 = vld [vmem:[%s3 + $0x310] sm:$0xff]
    %v125 = vld [vmem:[%s3 + $0x318] sm:$0xff]
    %v126 = vld [vmem:[%s3 + $0x320] sm:$0xff]
    %v127 = vld [vmem:[%s3 + $0x328] sm:$0xff]
    %v128 = vld [vmem:[%s3 + $0x330] sm:$0xff]
    %v129 = vld [vmem:[%s3 + $0x338] sm:$0xff]
    %v130 = vld [vmem:[%s3 + $0x340] sm:$0xff]
    %v131 = vld [vmem:[%s3 + $0x348] sm:$0xff]
    %v132 = vld [vmem:[%s3 + $0x350] sm:$0xff]
    %v133 = vld [vmem:[%s3 + $0x358] sm:$0xff]
    %v134 = vld [vmem:[%s3 + $0x360] sm:$0xff]
    %v135 = vld [vmem:[%s3 + $0x368] sm:$0xff]
    %v136 = vld [vmem:[%s3 + $0x370] sm:$0xff]
    %v137 = vld [vmem:[%s3 + $0x378] sm:$0xff]
    %v138 = vld [vmem:[%s3 + $0x380] sm:$0xff]
    %v139 = vld [vmem:[%s3 + $0x388] sm:$0xff]
    %v140 = vld [vmem:[%s3 + $0x390] sm:$0xff]
    %v141 = vld [vmem:[%s3 + $0x398] sm:$0xff]
    %v142 = vld [vmem:[%s3 + $0x3a0] sm:$0xff]
    %v143 = vld [vmem:[%s3 + $0x3a8] sm:$0xff]
    %v144 = vld [vmem:[%s3 + $0x3b0] sm:$0xff]
    %v145 = vld [vmem:[%s3 + $0x3b8] sm:$0xff]
    %v146 = vld [vmem:[%s3 + $0x3c0] sm:$0xff]
    %v147 = vld [vmem:[%s3 + $0x3c8] sm:$0xff]
    %v148 = vld [vmem:[%s3 + $0x3d0] sm:$0xff]
    %v149 = vld [vmem:[%s3 + $0x3d8] sm:$0xff]
    %v150 = vld [vmem:[%s3 + $0x3e0] sm:$0xff]
    %v151 = vld [vmem:[%s3 + $0x3e8] sm:$0xff]
    %v152 = vld [vmem:[%s3 + $0x3f0] sm:$0xff]
    %v153 = vld [vmem:[%s3 + $0x3f8] sm:$0xff]
    %v154 = vlaneseq
    %v155 = vshrl.u32 %v154, 7
    %v156 = vlaneseq
    %v157 = vand.u32 %v156, 127
    %v158 = vmul.u32 %v155, 8
    %vm159 = vcmp.ge.s32.totalorder %v157, %v158
    %v160 = vadd.s32 %v155, 1
    %v161 = vmul.u32 %v160, 8
    %vm162 = vcmp.lt.s32.totalorder %v157, %v161
    %vm163 = vmand %vm159, %vm162
    %v164 = vadd.s32 %v157, 128
    %v165 = vadd.s32 %v157, 256
    %v166 = vadd.s32 %v157, 384
    %v167 = vadd.s32 %v157, 512
    %v168 = vadd.s32 %v157, 640
    %v169 = vadd.s32 %v157, 768
    %v170 = vadd.s32 %v157, 896
    %v171 = vmul.u32 %v155, 128
    %vm172 = vcmp.ge.s32.totalorder %v157, %v171
    %vm173 = vcmp.ge.s32.totalorder %v164, %v171
    %vm174 = vcmp.ge.s32.totalorder %v165, %v171
    %vm175 = vcmp.ge.s32.totalorder %v166, %v171
    %vm176 = vcmp.ge.s32.totalorder %v167, %v171
    %vm177 = vcmp.ge.s32.totalorder %v168, %v171
    %vm178 = vcmp.ge.s32.totalorder %v169, %v171
    %vm179 = vcmp.ge.s32.totalorder %v170, %v171
    %v180 = vmul.u32 %v160, 128
    %vm181 = vcmp.lt.s32.totalorder %v157, %v180
    %vm182 = vcmp.lt.s32.totalorder %v164, %v180
    %vm183 = vcmp.lt.s32.totalorder %v165, %v180
    %vm184 = vcmp.lt.s32.totalorder %v166, %v180
    %vm185 = vcmp.lt.s32.totalorder %v167, %v180
    %vm186 = vcmp.lt.s32.totalorder %v168, %v180
    %vm187 = vcmp.lt.s32.totalorder %v169, %v180
    %vm188 = vcmp.lt.s32.totalorder %v170, %v180
    %vm189 = vmand %vm172, %vm181
    %vm190 = vmand %vm173, %vm182
    %vm191 = vmand %vm174, %vm183
    %vm192 = vmand %vm175, %vm184
    %vm193 = vmand %vm176, %vm185
    %vm194 = vmand %vm177, %vm186
    %vm195 = vmand %vm178, %vm187
    %vm196 = vmand %vm179, %vm188
    %v197 = vld [vmem:[%s0] sm:$0xff]
    %v198 = vld [vmem:[%s1] sm:$0xff]
    %v199 = vld [vmem:[%s1 + $0x8] sm:$0xff]
    %v200 = vld [vmem:[%s1 + $0x10] sm:$0xff]
    %v201 = vld [vmem:[%s1 + $0x18] sm:$0xff]
    %v202 = vld [vmem:[%s1 + $0x20] sm:$0xff]
    %v203 = vld [vmem:[%s1 + $0x28] sm:$0xff]
    %v204 = vld [vmem:[%s1 + $0x30] sm:$0xff]
    %v205 = vld [vmem:[%s1 + $0x38] sm:$0xff]
    %vm206 = vcmask 523264
    %v208 = vsel %vm206, %v197, 0
    %210 = vmatpush.msra.mxu0 0.0
    %211 = vmatpush.msra.mxu0 0.0
    %212 = vmatpush.msra.mxu0 0.0
    %213 = vmatpush.msra.mxu0 0.0
    %214 = vmatpush.msra.mxu0 0.0
    %215 = vmatpush.msra.mxu0 0.0
    %216 = vmatpush.msra.mxu0 0.0
    %217 = vmatpush.msra.mxu0 0.0
    %218 = vmatpush.msra.mxu0 %v205
    %219 = vmatpush.msra.mxu0 %v204
    %220 = vmatpush.msra.mxu0 %v203
    %221 = vmatpush.msra.mxu0 %v202
    %222 = vmatpush.msra.mxu0 %v201
    %223 = vmatpush.msra.mxu0 %v200
    %224 = vmatpush.msra.mxu0 %v199
    %225 = vmatpush.msra.mxu0 %v198
    %226 = vmatmul.f32.gmra.mxu0 %v208
    %v227 = vpop.f32.mrf.mxu0
    %v228 = vadd.f32 0.0, %v227
    %229 = vdwg.mxu0
    %v230 = vmul.f32 %v228, 0.015625
    %232 = vrot.lane.b32.xlu0 %v230, 8
    %v233 = vpop.permute.xlu0 %232
    %235 = vrot.lane.b32.xlu0 %v230, 16
    %v236 = vpop.permute.xlu0 %235
    %238 = vrot.lane.b32.xlu0 %v230, 24
    %v239 = vpop.permute.xlu0 %238
    %241 = vrot.lane.b32.xlu0 %v230, 32
    %v242 = vpop.permute.xlu0 %241
    %244 = vrot.lane.b32.xlu0 %v230, 40
    %v245 = vpop.permute.xlu0 %244
    %247 = vrot.lane.b32.xlu0 %v230, 48
    %v248 = vpop.permute.xlu0 %247
    %250 = vrot.lane.b32.xlu0 %v230, 56
    %v251 = vpop.permute.xlu0 %250
    %vm253 = vcmask 64512
    %v254 = vsel %vm253, %v230, %v233
    %vm255 = vcmask 130048
    %v256 = vsel %vm255, %v254, %v236
    %vm257 = vcmask 195584
    %v258 = vsel %vm257, %v256, %v239
    %vm259 = vcmask 261120
    %v260 = vsel %vm259, %v258, %v242
    %vm261 = vcmask 326656
    %v262 = vsel %vm261, %v260, %v245
    %vm263 = vcmask 392192
    %v264 = vsel %vm263, %v262, %v248
    %vm265 = vcmask 457728
    %v266 = vsel %vm265, %v264, %v251
    %v267 = vsel %vm163, %v266, 0.0
    %v269 = vsel %vm206, %v267, 0
    %271 = vmatpush.msra.mxu0 0.0
    %272 = vmatpush.msra.mxu0 0.0
    %273 = vmatpush.msra.mxu0 0.0
    %274 = vmatpush.msra.mxu0 0.0
    %275 = vmatpush.msra.mxu0 0.0
    %276 = vmatpush.msra.mxu0 0.0
    %277 = vmatpush.msra.mxu0 0.0
    %278 = vmatpush.msra.mxu0 0.0
    %279 = vmatpush.msra.mxu0 %v25
    %280 = vmatpush.msra.mxu0 %v24
    %281 = vmatpush.msra.mxu0 %v23
    %282 = vmatpush.msra.mxu0 %v22
    %283 = vmatpush.msra.mxu0 %v21
    %284 = vmatpush.msra.mxu0 %v20
    %285 = vmatpush.msra.mxu0 %v19
    %286 = vmatpush.msra.mxu0 %v18
    %287 = vmatmul.f32.gmra.mxu0 %v269
    %v288 = vpop.f32.mrf.mxu0
    %v289 = vadd.f32 0.0, %v288
    %290 = vdwg.mxu0
    %v291 = vmax.f32 %v289, 0.0
    %v292 = vsel %vm189, %v291, 0.0
    %v293 = vsel %vm190, %v291, 0.0
    %v294 = vsel %vm191, %v291, 0.0
    %v295 = vsel %vm192, %v291, 0.0
    %v296 = vsel %vm193, %v291, 0.0
    %v297 = vsel %vm194, %v291, 0.0
    %v298 = vsel %vm195, %v291, 0.0
    %v299 = vsel %vm196, %v291, 0.0
    %300 = vmatpush.msra.mxu0 %v41
    %301 = vmatpush.msra.mxu0 %v40
    %302 = vmatpush.msra.mxu0 %v39
    %303 = vmatpush.msra.mxu0 %v38
    %304 = vmatpush.msra.mxu0 %v37
    %305 = vmatpush.msra.mxu0 %v36
    %306 = vmatpush.msra.mxu0 %v35
    %307 = vmatpush.msra.mxu0 %v34
    %308 = vmatpush.msra.mxu0 %v33
    %309 = vmatpush.msra.mxu0 %v32
    %310 = vmatpush.msra.mxu0 %v31
    %311 = vmatpush.msra.mxu0 %v30
    %312 = vmatpush.msra.mxu0 %v29
    %313 = vmatpush.msra.mxu0 %v28
    %314 = vmatpush.msra.mxu0 %v27
    %315 = vmatpush.msra.mxu0 %v26
    %316 = vmatmul.f32.gmra.mxu0 %v292
    %v317 = vpop.f32.mrf.mxu0
    %v318 = vadd.f32 0.0, %v317
    %319 = vdwg.mxu0
    %320 = vmatpush.msra.mxu0 %v57
    %321 = vmatpush.msra.mxu0 %v56
    %322 = vmatpush.msra.mxu0 %v55
    %323 = vmatpush.msra.mxu0 %v54
    %324 = vmatpush.msra.mxu0 %v53
    %325 = vmatpush.msra.mxu0 %v52
    %326 = vmatpush.msra.mxu0 %v51
    %327 = vmatpush.msra.mxu0 %v50
    %328 = vmatpush.msra.mxu0 %v49
    %329 = vmatpush.msra.mxu0 %v48
    %330 = vmatpush.msra.mxu0 %v47
    %331 = vmatpush.msra.mxu0 %v46
    %332 = vmatpush.msra.mxu0 %v45
    %333 = vmatpush.msra.mxu0 %v44
    %334 = vmatpush.msra.mxu0 %v43
    %335 = vmatpush.msra.mxu0 %v42
    %336 = vmatmul.f32.gmra.mxu0 %v293
    %v337 = vpop.f32.mrf.mxu0
    %v338 = vadd.f32 %v318, %v337
    %339 = vdwg.mxu0
    %340 = vmatpush.msra.mxu0 %v73
    %341 = vmatpush.msra.mxu0 %v72
    %342 = vmatpush.msra.mxu0 %v71
    %343 = vmatpush.msra.mxu0 %v70
    %344 = vmatpush.msra.mxu0 %v69
    %345 = vmatpush.msra.mxu0 %v68
    %346 = vmatpush.msra.mxu0 %v67
    %347 = vmatpush.msra.mxu0 %v66
    %348 = vmatpush.msra.mxu0 %v65
    %349 = vmatpush.msra.mxu0 %v64
    %350 = vmatpush.msra.mxu0 %v63
    %351 = vmatpush.msra.mxu0 %v62
    %352 = vmatpush.msra.mxu0 %v61
    %353 = vmatpush.msra.mxu0 %v60
    %354 = vmatpush.msra.mxu0 %v59
    %355 = vmatpush.msra.mxu0 %v58
    %356 = vmatmul.f32.gmra.mxu0 %v294
    %v357 = vpop.f32.mrf.mxu0
    %v358 = vadd.f32 %v338, %v357
    %359 = vdwg.mxu0
    %360 = vmatpush.msra.mxu0 %v89
    %361 = vmatpush.msra.mxu0 %v88
    %362 = vmatpush.msra.mxu0 %v87
    %363 = vmatpush.msra.mxu0 %v86
    %364 = vmatpush.msra.mxu0 %v85
    %365 = vmatpush.msra.mxu0 %v84
    %366 = vmatpush.msra.mxu0 %v83
    %367 = vmatpush.msra.mxu0 %v82
    %368 = vmatpush.msra.mxu0 %v81
    %369 = vmatpush.msra.mxu0 %v80
    %370 = vmatpush.msra.mxu0 %v79
    %371 = vmatpush.msra.mxu0 %v78
    %372 = vmatpush.msra.mxu0 %v77
    %373 = vmatpush.msra.mxu0 %v76
    %374 = vmatpush.msra.mxu0 %v75
    %375 = vmatpush.msra.mxu0 %v74
    %376 = vmatmul.f32.gmra.mxu0 %v295
    %v377 = vpop.f32.mrf.mxu0
    %v378 = vadd.f32 %v358, %v377
    %379 = vdwg.mxu0
    %380 = vmatpush.msra.mxu0 %v105
    %381 = vmatpush.msra.mxu0 %v104
    %382 = vmatpush.msra.mxu0 %v103
    %383 = vmatpush.msra.mxu0 %v102
    %384 = vmatpush.msra.mxu0 %v101
    %385 = vmatpush.msra.mxu0 %v100
    %386 = vmatpush.msra.mxu0 %v99
    %387 = vmatpush.msra.mxu0 %v98
    %388 = vmatpush.msra.mxu0 %v97
    %389 = vmatpush.msra.mxu0 %v96
    %390 = vmatpush.msra.mxu0 %v95
    %391 = vmatpush.msra.mxu0 %v94
    %392 = vmatpush.msra.mxu0 %v93
    %393 = vmatpush.msra.mxu0 %v92
    %394 = vmatpush.msra.mxu0 %v91
    %395 = vmatpush.msra.mxu0 %v90
    %396 = vmatmul.f32.gmra.mxu0 %v296
    %v397 = vpop.f32.mrf.mxu0
    %v398 = vadd.f32 %v378, %v397
    %399 = vdwg.mxu0
    %400 = vmatpush.msra.mxu0 %v121
    %401 = vmatpush.msra.mxu0 %v120
    %402 = vmatpush.msra.mxu0 %v119
    %403 = vmatpush.msra.mxu0 %v118
    %404 = vmatpush.msra.mxu0 %v117
    %405 = vmatpush.msra.mxu0 %v116
    %406 = vmatpush.msra.mxu0 %v115
    %407 = vmatpush.msra.mxu0 %v114
    %408 = vmatpush.msra.mxu0 %v113
    %409 = vmatpush.msra.mxu0 %v112
    %410 = vmatpush.msra.mxu0 %v111
    %411 = vmatpush.msra.mxu0 %v110
    %412 = vmatpush.msra.mxu0 %v109
    %413 = vmatpush.msra.mxu0 %v108
    %414 = vmatpush.msra.mxu0 %v107
    %415 = vmatpush.msra.mxu0 %v106
    %416 = vmatmul.f32.gmra.mxu0 %v297
    %v417 = vpop.f32.mrf.mxu0
    %v418 = vadd.f32 %v398, %v417
    %419 = vdwg.mxu0
    %420 = vmatpush.msra.mxu0 %v137
    %421 = vmatpush.msra.mxu0 %v136
    %422 = vmatpush.msra.mxu0 %v135
    %423 = vmatpush.msra.mxu0 %v134
    %424 = vmatpush.msra.mxu0 %v133
    %425 = vmatpush.msra.mxu0 %v132
    %426 = vmatpush.msra.mxu0 %v131
    %427 = vmatpush.msra.mxu0 %v130
    %428 = vmatpush.msra.mxu0 %v129
    %429 = vmatpush.msra.mxu0 %v128
    %430 = vmatpush.msra.mxu0 %v127
    %431 = vmatpush.msra.mxu0 %v126
    %432 = vmatpush.msra.mxu0 %v125
    %433 = vmatpush.msra.mxu0 %v124
    %434 = vmatpush.msra.mxu0 %v123
    %435 = vmatpush.msra.mxu0 %v122
    %436 = vmatmul.f32.gmra.mxu0 %v298
    %v437 = vpop.f32.mrf.mxu0
    %v438 = vadd.f32 %v418, %v437
    %439 = vdwg.mxu0
    %440 = vmatpush.msra.mxu0 %v153
    %441 = vmatpush.msra.mxu0 %v152
    %442 = vmatpush.msra.mxu0 %v151
    %443 = vmatpush.msra.mxu0 %v150
    %444 = vmatpush.msra.mxu0 %v149
    %445 = vmatpush.msra.mxu0 %v148
    %446 = vmatpush.msra.mxu0 %v147
    %447 = vmatpush.msra.mxu0 %v146
    %448 = vmatpush.msra.mxu0 %v145
    %449 = vmatpush.msra.mxu0 %v144
    %450 = vmatpush.msra.mxu0 %v143
    %451 = vmatpush.msra.mxu0 %v142
    %452 = vmatpush.msra.mxu0 %v141
    %453 = vmatpush.msra.mxu0 %v140
    %454 = vmatpush.msra.mxu0 %v139
    %455 = vmatpush.msra.mxu0 %v138
    %456 = vmatmul.f32.gmra.mxu0 %v299
    %v457 = vpop.f32.mrf.mxu0
    %v458 = vadd.f32 %v438, %v457
    %459 = vdwg.mxu0
    %460 = vst.msk [vmem:[#allocation2] sm:$0xff] %vm206, %v458
    %s461 = scalar_lea.vmem %s0, 8
    %v462 = vld [vmem:[%s461] sm:$0xff]
    %s463 = scalar_lea.vmem %s1, 64
    %v464 = vld [vmem:[%s463] sm:$0xff]
    %v465 = vld [vmem:[%s463 + $0x8] sm:$0xff]
    %v466 = vld [vmem:[%s463 + $0x10] sm:$0xff]
    %v467 = vld [vmem:[%s463 + $0x18] sm:$0xff]
    %v468 = vld [vmem:[%s463 + $0x20] sm:$0xff]
    %v469 = vld [vmem:[%s463 + $0x28] sm:$0xff]
    %v470 = vld [vmem:[%s463 + $0x30] sm:$0xff]
    %v471 = vld [vmem:[%s463 + $0x38] sm:$0xff]
    %v473 = vsel %vm206, %v462, 0
    %475 = vmatpush.msra.mxu0 0.0
    %476 = vmatpush.msra.mxu0 0.0
    %477 = vmatpush.msra.mxu0 0.0
    %478 = vmatpush.msra.mxu0 0.0
    %479 = vmatpush.msra.mxu0 0.0
    %480 = vmatpush.msra.mxu0 0.0
    %481 = vmatpush.msra.mxu0 0.0
    %482 = vmatpush.msra.mxu0 0.0
    %483 = vmatpush.msra.mxu0 %v471
    %484 = vmatpush.msra.mxu0 %v470
    %485 = vmatpush.msra.mxu0 %v469
    %486 = vmatpush.msra.mxu0 %v468
    %487 = vmatpush.msra.mxu0 %v467
    %488 = vmatpush.msra.mxu0 %v466
    %489 = vmatpush.msra.mxu0 %v465
    %490 = vmatpush.msra.mxu0 %v464
    %491 = vmatmul.f32.gmra.mxu0 %v473
    %v492 = vpop.f32.mrf.mxu0
    %v493 = vadd.f32 0.0, %v492
    %494 = vdwg.mxu0
    %v495 = vmul.f32 %v493, 0.015625
    %497 = vrot.lane.b32.xlu0 %v495, 8
    %v498 = vpop.permute.xlu0 %497
    %500 = vrot.lane.b32.xlu0 %v495, 16
    %v501 = vpop.permute.xlu0 %500
    %503 = vrot.lane.b32.xlu0 %v495, 24
    %v504 = vpop.permute.xlu0 %503
    %506 = vrot.lane.b32.xlu0 %v495, 32
    %v507 = vpop.permute.xlu0 %506
    %509 = vrot.lane.b32.xlu0 %v495, 40
    %v510 = vpop.permute.xlu0 %509
    %512 = vrot.lane.b32.xlu0 %v495, 48
    %v513 = vpop.permute.xlu0 %512
    %515 = vrot.lane.b32.xlu0 %v495, 56
    %v516 = vpop.permute.xlu0 %515
    %v518 = vsel %vm253, %v495, %v498
    %v519 = vsel %vm255, %v518, %v501
    %v520 = vsel %vm257, %v519, %v504
    %v521 = vsel %vm259, %v520, %v507
    %v522 = vsel %vm261, %v521, %v510
    %v523 = vsel %vm263, %v522, %v513
    %v524 = vsel %vm265, %v523, %v516
    %v525 = vsel %vm163, %v524, 0.0
    %v527 = vsel %vm206, %v525, 0
    %529 = vmatpush.msra.mxu0 0.0
    %530 = vmatpush.msra.mxu0 0.0
    %531 = vmatpush.msra.mxu0 0.0
    %532 = vmatpush.msra.mxu0 0.0
    %533 = vmatpush.msra.mxu0 0.0
    %534 = vmatpush.msra.mxu0 0.0
    %535 = vmatpush.msra.mxu0 0.0
    %536 = vmatpush.msra.mxu0 0.0
    %537 = vmatpush.msra.mxu0 %v25
    %538 = vmatpush.msra.mxu0 %v24
    %539 = vmatpush.msra.mxu0 %v23
    %540 = vmatpush.msra.mxu0 %v22
    %541 = vmatpush.msra.mxu0 %v21
    %542 = vmatpush.msra.mxu0 %v20
    %543 = vmatpush.msra.mxu0 %v19
    %544 = vmatpush.msra.mxu0 %v18
    %545 = vmatmul.f32.gmra.mxu0 %v527
    %v546 = vpop.f32.mrf.mxu0
    %v547 = vadd.f32 0.0, %v546
    %548 = vdwg.mxu0
    %v549 = vmax.f32 %v547, 0.0
    %v550 = vsel %vm189, %v549, 0.0
    %v551 = vsel %vm190, %v549, 0.0
    %v552 = vsel %vm191, %v549, 0.0
    %v553 = vsel %vm192, %v549, 0.0
    %v554 = vsel %vm193, %v549, 0.0
    %v555 = vsel %vm194, %v549, 0.0
    %v556 = vsel %vm195, %v549, 0.0
    %v557 = vsel %vm196, %v549, 0.0
    %558 = vmatpush.msra.mxu0 %v41
    %559 = vmatpush.msra.mxu0 %v40
    %560 = vmatpush.msra.mxu0 %v39
    %561 = vmatpush.msra.mxu0 %v38
    %562 = vmatpush.msra.mxu0 %v37
    %563 = vmatpush.msra.mxu0 %v36
    %564 = vmatpush.msra.mxu0 %v35
    %565 = vmatpush.msra.mxu0 %v34
    %566 = vmatpush.msra.mxu0 %v33
    %567 = vmatpush.msra.mxu0 %v32
    %568 = vmatpush.msra.mxu0 %v31
    %569 = vmatpush.msra.mxu0 %v30
    %570 = vmatpush.msra.mxu0 %v29
    %571 = vmatpush.msra.mxu0 %v28
    %572 = vmatpush.msra.mxu0 %v27
    %573 = vmatpush.msra.mxu0 %v26
    %574 = vmatmul.f32.gmra.mxu0 %v550
    %v575 = vpop.f32.mrf.mxu0
    %v576 = vadd.f32 0.0, %v575
    %577 = vdwg.mxu0
    %578 = vmatpush.msra.mxu0 %v57
    %579 = vmatpush.msra.mxu0 %v56
    %580 = vmatpush.msra.mxu0 %v55
    %581 = vmatpush.msra.mxu0 %v54
    %582 = vmatpush.msra.mxu0 %v53
    %583 = vmatpush.msra.mxu0 %v52
    %584 = vmatpush.msra.mxu0 %v51
    %585 = vmatpush.msra.mxu0 %v50
    %586 = vmatpush.msra.mxu0 %v49
    %587 = vmatpush.msra.mxu0 %v48
    %588 = vmatpush.msra.mxu0 %v47
    %589 = vmatpush.msra.mxu0 %v46
    %590 = vmatpush.msra.mxu0 %v45
    %591 = vmatpush.msra.mxu0 %v44
    %592 = vmatpush.msra.mxu0 %v43
    %593 = vmatpush.msra.mxu0 %v42
    %594 = vmatmul.f32.gmra.mxu0 %v551
    %v595 = vpop.f32.mrf.mxu0
    %v596 = vadd.f32 %v576, %v595
    %597 = vdwg.mxu0
    %598 = vmatpush.msra.mxu0 %v73
    %599 = vmatpush.msra.mxu0 %v72
    %600 = vmatpush.msra.mxu0 %v71
    %601 = vmatpush.msra.mxu0 %v70
    %602 = vmatpush.msra.mxu0 %v69
    %603 = vmatpush.msra.mxu0 %v68
    %604 = vmatpush.msra.mxu0 %v67
    %605 = vmatpush.msra.mxu0 %v66
    %606 = vmatpush.msra.mxu0 %v65
    %607 = vmatpush.msra.mxu0 %v64
    %608 = vmatpush.msra.mxu0 %v63
    %609 = vmatpush.msra.mxu0 %v62
    %610 = vmatpush.msra.mxu0 %v61
    %611 = vmatpush.msra.mxu0 %v60
    %612 = vmatpush.msra.mxu0 %v59
    %613 = vmatpush.msra.mxu0 %v58
    %614 = vmatmul.f32.gmra.mxu0 %v552
    %v615 = vpop.f32.mrf.mxu0
    %v616 = vadd.f32 %v596, %v615
    %617 = vdwg.mxu0
    %618 = vmatpush.msra.mxu0 %v89
    %619 = vmatpush.msra.mxu0 %v88
    %620 = vmatpush.msra.mxu0 %v87
    %621 = vmatpush.msra.mxu0 %v86
    %622 = vmatpush.msra.mxu0 %v85
    %623 = vmatpush.msra.mxu0 %v84
    %624 = vmatpush.msra.mxu0 %v83
    %625 = vmatpush.msra.mxu0 %v82
    %626 = vmatpush.msra.mxu0 %v81
    %627 = vmatpush.msra.mxu0 %v80
    %628 = vmatpush.msra.mxu0 %v79
    %629 = vmatpush.msra.mxu0 %v78
    %630 = vmatpush.msra.mxu0 %v77
    %631 = vmatpush.msra.mxu0 %v76
    %632 = vmatpush.msra.mxu0 %v75
    %633 = vmatpush.msra.mxu0 %v74
    %634 = vmatmul.f32.gmra.mxu0 %v553
    %v635 = vpop.f32.mrf.mxu0
    %v636 = vadd.f32 %v616, %v635
    %637 = vdwg.mxu0
    %638 = vmatpush.msra.mxu0 %v105
    %639 = vmatpush.msra.mxu0 %v104
    %640 = vmatpush.msra.mxu0 %v103
    %641 = vmatpush.msra.mxu0 %v102
    %642 = vmatpush.msra.mxu0 %v101
    %643 = vmatpush.msra.mxu0 %v100
    %644 = vmatpush.msra.mxu0 %v99
    %645 = vmatpush.msra.mxu0 %v98
    %646 = vmatpush.msra.mxu0 %v97
    %647 = vmatpush.msra.mxu0 %v96
    %648 = vmatpush.msra.mxu0 %v95
    %649 = vmatpush.msra.mxu0 %v94
    %650 = vmatpush.msra.mxu0 %v93
    %651 = vmatpush.msra.mxu0 %v92
    %652 = vmatpush.msra.mxu0 %v91
    %653 = vmatpush.msra.mxu0 %v90
    %654 = vmatmul.f32.gmra.mxu0 %v554
    %v655 = vpop.f32.mrf.mxu0
    %v656 = vadd.f32 %v636, %v655
    %657 = vdwg.mxu0
    %658 = vmatpush.msra.mxu0 %v121
    %659 = vmatpush.msra.mxu0 %v120
    %660 = vmatpush.msra.mxu0 %v119
    %661 = vmatpush.msra.mxu0 %v118
    %662 = vmatpush.msra.mxu0 %v117
    %663 = vmatpush.msra.mxu0 %v116
    %664 = vmatpush.msra.mxu0 %v115
    %665 = vmatpush.msra.mxu0 %v114
    %666 = vmatpush.msra.mxu0 %v113
    %667 = vmatpush.msra.mxu0 %v112
    %668 = vmatpush.msra.mxu0 %v111
    %669 = vmatpush.msra.mxu0 %v110
    %670 = vmatpush.msra.mxu0 %v109
    %671 = vmatpush.msra.mxu0 %v108
    %672 = vmatpush.msra.mxu0 %v107
    %673 = vmatpush.msra.mxu0 %v106
    %674 = vmatmul.f32.gmra.mxu0 %v555
    %v675 = vpop.f32.mrf.mxu0
    %v676 = vadd.f32 %v656, %v675
    %677 = vdwg.mxu0
    %678 = vmatpush.msra.mxu0 %v137
    %679 = vmatpush.msra.mxu0 %v136
    %680 = vmatpush.msra.mxu0 %v135
    %681 = vmatpush.msra.mxu0 %v134
    %682 = vmatpush.msra.mxu0 %v133
    %683 = vmatpush.msra.mxu0 %v132
    %684 = vmatpush.msra.mxu0 %v131
    %685 = vmatpush.msra.mxu0 %v130
    %686 = vmatpush.msra.mxu0 %v129
    %687 = vmatpush.msra.mxu0 %v128
    %688 = vmatpush.msra.mxu0 %v127
    %689 = vmatpush.msra.mxu0 %v126
    %690 = vmatpush.msra.mxu0 %v125
    %691 = vmatpush.msra.mxu0 %v124
    %692 = vmatpush.msra.mxu0 %v123
    %693 = vmatpush.msra.mxu0 %v122
    %694 = vmatmul.f32.gmra.mxu0 %v556
    %v695 = vpop.f32.mrf.mxu0
    %v696 = vadd.f32 %v676, %v695
    %697 = vdwg.mxu0
    %698 = vmatpush.msra.mxu0 %v153
    %699 = vmatpush.msra.mxu0 %v152
    %700 = vmatpush.msra.mxu0 %v151
    %701 = vmatpush.msra.mxu0 %v150
    %702 = vmatpush.msra.mxu0 %v149
    %703 = vmatpush.msra.mxu0 %v148
    %704 = vmatpush.msra.mxu0 %v147
    %705 = vmatpush.msra.mxu0 %v146
    %706 = vmatpush.msra.mxu0 %v145
    %707 = vmatpush.msra.mxu0 %v144
    %708 = vmatpush.msra.mxu0 %v143
    %709 = vmatpush.msra.mxu0 %v142
    %710 = vmatpush.msra.mxu0 %v141
    %711 = vmatpush.msra.mxu0 %v140
    %712 = vmatpush.msra.mxu0 %v139
    %713 = vmatpush.msra.mxu0 %v138
    %714 = vmatmul.f32.gmra.mxu0 %v557
    %v715 = vpop.f32.mrf.mxu0
    %v716 = vadd.f32 %v696, %v715
    %717 = vdwg.mxu0
    %s718 = scalar_lea.vmem [#allocation2], 8
    %719 = vst.msk [vmem:[%s718] sm:$0xff] %vm206, %v716
    // Predicated region
    $region18: #{tpu_custom_call.1} parent=1 // pred_check
      _
    $region19: #{tpu_custom_call.1} parent=1 // pred_check_branch
      %721 = sbr.rel (0) target = $region21
    $region20: #{tpu_custom_call.1} parent=1 // pred_region
      %723 = vsyncadd [#allocation3], 0
      %s724 = sshll.u32 [#allocation2], 4
      %s725 = int_to_ptr.vmem [resolvable:$true] %s724
      %s726 = sshll.u32 %s4, 4
      %s727 = int_to_ptr.hbm [resolvable:$true] %s726
      %732 = dma.vmem_to_hbm [thread:$0]  %s725, 256, %s727, [#allocation3], 128, 128, 8
    $region21: #{tpu_custom_call.1} parent=1 // pred_fallthru
      _
    // Predicated region
    $region22: #{tpu_custom_call.1} parent=1 // pred_check
      _
    $region23: #{tpu_custom_call.1} parent=1 // pred_check_branch
      %734 = sbr.rel (0) target = $region25
    $region24: #{tpu_custom_call.1} parent=1 // pred_region
      %736 = dma.done [#allocation3], 256
    $region25: #{tpu_custom_call.1} parent=1 // pred_fallthru
      _
    %737 = vsyncpa [#allocation3], 1

</llo_original>
